<compile_context>
chip_gen: v7x
topology: tpu7x:2x2x1
jax: 0.10.0
libtpu: 0.0.40
codegen_flags: <defaults>
</compile_context>

<pallas_src>
import functools

import jax
import jax.numpy as jnp
from jax import lax
from jax.experimental import pallas as pl
from jax.experimental.pallas import tpu as pltpu


def _round_up(n, m):
    return ((n + m - 1) // m) * m


# ---------------------------------------------------------------------------
# Kernel
# ---------------------------------------------------------------------------
def _dqn_kernel(x_ref, w1_ref, w2_ref, w3_ref, wh1_ref, wq_ref,
                vecs_ref, bh1_ref, bq_ref, out_ref):
    x = x_ref[...].astype(jnp.float32)

    # Per-feature vectors packed as rows of one (9, H) f32 array:
    #   b1, g1, be1, b2, g2, be2, b3, g3, be3  (static sublane slices -> free)
    vecs = vecs_ref[...]
    b1, g1, be1 = vecs[0:1, :], vecs[1:2, :], vecs[2:3, :]
    b2, g2, be2 = vecs[3:4, :], vecs[4:5, :], vecs[5:6, :]
    b3, g3, be3 = vecs[6:7, :], vecs[7:8, :], vecs[8:9, :]

    def linear(h, w_ref, b):
        # Cast activations to the weight dtype (bf16 weights -> single bf16
        # MXU pass on all generations); accumulate in f32.
        return jnp.dot(h.astype(w_ref.dtype), w_ref[...],
                       preferred_element_type=jnp.float32) + b

    def layernorm(h, g, b):
        # Shift-stabilised one-pass variance: shifting by the first column
        # removes any large common mean before E[d^2] - mean(d)^2 (no
        # catastrophic cancellation) while keeping the two lane reductions
        # independent so they can overlap on the XLU.
        d = h - h[:, 0:1]
        mu = jnp.mean(d, axis=-1, keepdims=True)
        var = jnp.mean(d * d, axis=-1, keepdims=True) - mu * mu
        return (d - mu) * lax.rsqrt(var + 1e-5) * g + b

    relu = lambda v: jnp.maximum(v, 0.0)

    # Trunk.
    h1 = relu(layernorm(linear(x, w1_ref, b1), g1, be1))
    h2 = relu(layernorm(linear(h1, w2_ref, b2), g2, be2))
    # TODO(synk): nn.Dropout(0.1) is identity at inference; training-mode
    #             dropout would use pltpu.prng_seed / pltpu.prng_random_bits.
    h3 = relu(layernorm(linear(h2, w3_ref, b3) + h1, g3, be3))

    # Fused heads:
    #   wh1: the three head first layers as one (H, 3*half) matmul.
    #   wq : block-diagonal head second layers with the dueling epilogue
    #        folded in at pack time and padded to 128 output lanes, so this
    #        matmul *is* the Q-values and the store is a full unmasked vst.
    z = relu(linear(h3, wh1_ref, bh1_ref[...]))          # (TB, 3*half)
    q = linear(z, wq_ref, bq_ref[...])                   # (TB, out_pad)

    out_ref[...] = q.astype(out_ref.dtype)
    # NOTE: if a bundle dump ever shows the 6 LN reductions saturating the
    # XLU, they can be moved to the idle MXU via a (H, 1) ones-vector dot;
    # left as-is pending measurement (max-not-sum rule).


# ---------------------------------------------------------------------------
# Parameter init (mirrors the PyTorch module's __init__) and packing
# ---------------------------------------------------------------------------
def _xavier_uniform(key, fan_in, fan_out):
    limit = (6.0 / (fan_in + fan_out)) ** 0.5
    return jax.random.uniform(key, (fan_in, fan_out), dtype=jnp.float32,
                              minval=-limit, maxval=limit)


def init_dqn_params(key, input_dim, hidden_dim=256, output_dim=10):
    """Raw per-layer parameters, same layout/semantics as the nn.Module."""
    half = hidden_dim // 2
    out_half = output_dim // 2
    keys = jax.random.split(key, 9)

    def lin(k, fi, fo):
        return _xavier_uniform(k, fi, fo), jnp.zeros((1, fo), jnp.float32)

    def ln(dim):
        return jnp.ones((1, dim), jnp.float32), jnp.zeros((1, dim), jnp.float32)

    w1, b1 = lin(keys[0], input_dim, hidden_dim)
    w2, b2 = lin(keys[1], hidden_dim, hidden_dim)
    w3, b3 = lin(keys[2], hidden_dim, hidden_dim)
    g1, be1 = ln(hidden_dim)
    g2, be2 = ln(hidden_dim)
    g3, be3 = ln(hidden_dim)
    wv1, bv1 = lin(keys[3], hidden_dim, half)
    wv2, bv2 = lin(keys[4], half, 1)
    ws1, bs1 = lin(keys[5], hidden_dim, half)
    ws2, bs2 = lin(keys[6], half, out_half)
    wa1, ba1 = lin(keys[7], hidden_dim, half)
    wa2, ba2 = lin(keys[8], half, out_half)

    return (w1, b1, g1, be1, w2, b2, g2, be2, w3, b3, g3, be3,
            wv1, bv1, wv2, bv2, ws1, bs1, ws2, bs2, wa1, ba1, wa2, ba2)


def pack_params(raw_params, param_dtype=jnp.bfloat16):
    """Pack 25 arrays into 8 kernel inputs.

    * Head first layers fused into one (H, 3*half) matmul.
    * Head second layers fused into one block-diagonal matmul with the
      dueling epilogue (value broadcast, adv - mean(adv)) folded in — in f32,
      before any low-precision cast — and zero-padded to a multiple of 128
      output lanes so the kernel's output store is lane-dense / unmasked.
    * Weight matrices default to bf16 (bf16-native MXU on v5e/v6e/v7x);
      biases and LayerNorm vectors stay f32.
    """
    (w1, b1, g1, be1, w2, b2, g2, be2, w3, b3, g3, be3,
     wv1, bv1, wv2, bv2, ws1, bs1, ws2, bs2, wa1, ba1, wa2, ba2) = raw_params

    half = wv1.shape[1]
    oh = ws2.shape[1]
    out_pad = max(128, _round_up(2 * oh, 128))
    hp = lambda a, b: jnp.dot(a, b, precision=lax.Precision.HIGHEST)

    # Fused head layer 1: (H, 3*half).
    wh1 = jnp.concatenate([wv1, ws1, wa1], axis=1)
    bh1 = jnp.concatenate([bv1, bs1, ba1], axis=1)

    # Fused head layer 2 with the dueling epilogue folded in (f32):
    #   steer_q = value + steer_adv - mean(steer_adv)
    #           = zv @ (wv2·1^T) + zs @ (ws2 @ C) + (bv2 + bs2 - mean(bs2))
    # with C = I - 11^T/oh; accel likewise in columns oh:2*oh.
    centering = jnp.eye(oh, dtype=jnp.float32) - jnp.full((oh, oh), 1.0 / oh,
                                                          jnp.float32)
    wq = jnp.zeros((3 * half, out_pad), jnp.float32)
    wq = wq.at[0:half, 0:oh].set(jnp.broadcast_to(wv2, (half, oh)))
    wq = wq.at[0:half, oh:2 * oh].set(jnp.broadcast_to(wv2, (half, oh)))
    wq = wq.at[half:2 * half, 0:oh].set(hp(ws2, centering))
    wq = wq.at[2 * half:3 * half, oh:2 * oh].set(hp(wa2, centering))

    bq = jnp.zeros((1, out_pad), jnp.float32)
    bq = bq.at[:, 0:oh].set(bv2 + bs2 - jnp.mean(bs2))
    bq = bq.at[:, oh:2 * oh].set(bv2 + ba2 - jnp.mean(ba2))

    # All per-feature (1, H) vectors stacked into one (9, H) f32 array.
    vecs = jnp.concatenate([b1, g1, be1, b2, g2, be2, b3, g3, be3], axis=0)

    cast = lambda w: w.astype(param_dtype)
    return (cast(w1), cast(w2), cast(w3), cast(wh1), cast(wq),
            vecs.astype(jnp.float32),
            bh1.astype(jnp.float32), bq.astype(jnp.float32))


# ---------------------------------------------------------------------------
# Wrapper
# ---------------------------------------------------------------------------
def _choose_tiles(batch, block_batch):
    """Balanced batch tiles: padding waste <8 rows/tile, grid >= 2 whenever
    possible so both v7x TensorCores get work under ("parallel",)."""
    n_tiles = max(pl.cdiv(batch, block_batch), 1)
    if n_tiles < 2 and batch > 8:
        n_tiles = 2
    tb = _round_up(pl.cdiv(batch, n_tiles), 8)
    return n_tiles, tb


@functools.partial(jax.jit,
                   static_argnames=("output_dim", "block_batch",
                                    "single_buffer_weights"))
def dqn_forward(x, packed_params, *, output_dim=10, block_batch=1024,
                single_buffer_weights=False):
    """DQNetwork forward; returns (steer_q, accel_q).

    block_batch: max rows per grid step. 1024 is VMEM-safe on all generations
    at hidden_dim=256; sweep 1024-2048 on v5e/v6e (128 MiB VMEM), keep <=1024
    on v7x (64 MiB per TensorCore).
    """
    single_input = (x.ndim == 1)
    if single_input:
        x = x[None, :]
    x = x.astype(jnp.float32)

    w1, w2, w3, wh1, wq, vecs, bh1, bq = packed_params
    batch, in_dim = x.shape
    hidden = w1.shape[1]
    three_half = wh1.shape[1]
    out_pad = wq.shape[1]
    oh = output_dim // 2

    n_tiles, tb = _choose_tiles(batch, block_batch)
    b_pad = n_tiles * tb
    if b_pad != batch:
        # Zero rows are numerically benign through LayerNorm and sliced off.
        x = jnp.pad(x, ((0, b_pad - batch), (0, 0)))
    grid = (n_tiles,)

    def resident(shape):
        # Grid-constant blocks (weights / biases): stay VMEM-resident.
        if single_buffer_weights:
            # The second pipeline buffer is pure waste for grid-constant
            # blocks; only worth flipping on when hidden_dim >> 256.
            return pl.BlockSpec(shape, lambda i: (0, 0),
                                pipeline_mode=pl.Buffered(1))
        return pl.BlockSpec(shape, lambda i: (0, 0))

    in_specs = [
        pl.BlockSpec((tb, in_dim), lambda i: (i, 0)),   # x (streamed)
        resident((in_dim, hidden)),                     # w1
        resident((hidden, hidden)),                     # w2
        resident((hidden, hidden)),                     # w3
        resident((hidden, three_half)),                 # wh1 (fused heads L1)
        resident((three_half, out_pad)),                # wq  (heads L2 + dueling fold)
        resident((9, hidden)),                          # packed LN/bias vectors
        resident((1, three_half)),                      # bh1
        resident((1, out_pad)),                         # bq
    ]
    out_specs = pl.BlockSpec((tb, out_pad), lambda i: (i, 0))

    flops = 2 * b_pad * (in_dim * hidden + 2 * hidden * hidden
                         + hidden * three_half + three_half * out_pad)
    weight_bytes = sum(int(p.size) * p.dtype.itemsize for p in packed_params)
    bytes_accessed = int(4 * b_pad * in_dim + 4 * b_pad * out_pad + weight_bytes)
    cost = pl.CostEstimate(flops=int(flops), transcendentals=int(3 * b_pad),
                           bytes_accessed=bytes_accessed)

    # Explicit scoped-VMEM budget: double-buffered x/out tiles + resident
    # weights + activation headroom; floored at 32 MiB, capped at 64 MiB
    # (v7x physical — v5e/v6e have 128 MiB if you want to raise it further).
    act_bytes = tb * 4 * (2 * in_dim + 2 * out_pad + 10 * hidden + 2 * three_half)
    vmem_limit = int(min(64 << 20,
                         max(32 << 20, 2 * weight_bytes + act_bytes + (2 << 20))))

    out = pl.pallas_call(
        _dqn_kernel,
        out_shape=jax.ShapeDtypeStruct((b_pad, out_pad), jnp.float32),
        grid=grid,
        in_specs=in_specs,
        out_specs=out_specs,
        compiler_params=pltpu.CompilerParams(
            dimension_semantics=("parallel",),     # megacore sharding on v7x
            vmem_limit_bytes=vmem_limit),
        cost_estimate=cost,
    )(x, *packed_params)

    steer_q = out[:batch, 0:oh]
    accel_q = out[:batch, oh:2 * oh]
    if single_input:
        steer_q, accel_q = steer_q[0], accel_q[0]
    return steer_q, accel_q


# ---------------------------------------------------------------------------
# Pure-JAX references
# ---------------------------------------------------------------------------
def dqn_forward_torch_ref(x, raw_params):
    """Mirrors the PyTorch module forward exactly, in f32."""
    (w1, b1, g1, be1, w2, b2, g2, be2, w3, b3, g3, be3,
     wv1, bv1, wv2, bv2, ws1, bs1, ws2, bs2, wa1, ba1, wa2, ba2) = raw_params

    dot = lambda a, w: jnp.dot(a, w, precision=lax.Precision.HIGHEST)

    def ln(h, g, b):
        mu = jnp.mean(h, axis=-1, keepdims=True)
        var = jnp.mean((h - mu) ** 2, axis=-1, keepdims=True)
        return (h - mu) / jnp.sqrt(var + 1e-5) * g + b

    relu = lambda v: jnp.maximum(v, 0.0)
    h1 = relu(ln(dot(x, w1) + b1, g1, be1))
    h2 = relu(ln(dot(h1, w2) + b2, g2, be2))
    h3 = relu(ln(dot(h2, w3) + b3 + h1, g3, be3))
    value = dot(relu(dot(h3, wv1) + bv1), wv2) + bv2
    steer_adv = dot(relu(dot(h3, ws1) + bs1), ws2) + bs2
    accel_adv = dot(relu(dot(h3, wa1) + ba1), wa2) + ba2
    steer_q = value + (steer_adv - steer_adv.mean(axis=1, keepdims=True))
    accel_q = value + (accel_adv - accel_adv.mean(axis=1, keepdims=True))
    return steer_q, accel_q


def dqn_forward_packed_ref(x, packed, output_dim=10):
    """Mirrors the kernel math (packed/folded params, same operand casts)."""
    w1, w2, w3, wh1, wq, vecs, bh1, bq = packed

    def dot(a, w):
        return jnp.dot(a.astype(w.dtype), w, preferred_element_type=jnp.float32,
                       precision=lax.Precision.HIGHEST)

    b1, g1, be1 = vecs[0:1], vecs[1:2], vecs[2:3]
    b2, g2, be2 = vecs[3:4], vecs[4:5], vecs[5:6]
    b3, g3, be3 = vecs[6:7], vecs[7:8], vecs[8:9]

    def ln(h, g, b):
        d = h - h[:, 0:1]
        mu = jnp.mean(d, axis=-1, keepdims=True)
        var = jnp.mean(d * d, axis=-1, keepdims=True) - mu * mu
        return (d - mu) * lax.rsqrt(var + 1e-5) * g + b

    relu = lambda v: jnp.maximum(v, 0.0)
    h1 = relu(ln(dot(x, w1) + b1, g1, be1))
    h2 = relu(ln(dot(h1, w2) + b2, g2, be2))
    h3 = relu(ln(dot(h2, w3) + b3 + h1, g3, be3))
    z = relu(dot(h3, wh1) + bh1)
    q = dot(z, wq) + bq
    oh = output_dim // 2
    return q[:, 0:oh], q[:, oh:2 * oh]


# ---------------------------------------------------------------------------
# Self-test
# ---------------------------------------------------------------------------
if __name__ == "__main__":
    INPUT_DIM = 32
    HIDDEN_DIM = 32
    OUTPUT_DIM = 10
    BATCH = 4

    key = jax.random.PRNGKey(0)
    k_x, k_p, k_x2 = jax.random.split(key, 3)

    x = jax.random.normal(k_x, (BATCH, INPUT_DIM), dtype=jnp.float32)
    raw = init_dqn_params(k_p, INPUT_DIM, HIDDEN_DIM, OUTPUT_DIM)
    s_ref, a_ref = dqn_forward_torch_ref(x, raw)

    # f32 weights: matches the original module semantics (the dueling fold is
    # exact up to f32 rounding).
    packed_f32 = pack_params(raw, jnp.float32)
    steer_q, accel_q = dqn_forward(x, packed_f32, output_dim=OUTPUT_DIM)
    jax.block_until_ready((steer_q, accel_q))
    assert steer_q.shape == (BATCH, OUTPUT_DIM // 2)
    assert accel_q.shape == (BATCH, OUTPUT_DIM // 2)
    assert jnp.allclose(steer_q, s_ref, atol=1e-4, rtol=1e-4)
    assert jnp.allclose(accel_q, a_ref, atol=1e-4, rtol=1e-4)

    # Default packing (bf16 weights — the fast path on v5e/v6e/v7x): compare
    # against a reference that mirrors the packed/folded math exactly.
    packed_bf16 = pack_params(raw)
    steer_bf, accel_bf = dqn_forward(x, packed_bf16, output_dim=OUTPUT_DIM)
    jax.block_until_ready((steer_bf, accel_bf))
    s_pref, a_pref = dqn_forward_packed_ref(x, packed_bf16, OUTPUT_DIM)
    assert jnp.allclose(steer_bf, s_pref, atol=1e-2, rtol=1e-2)
    assert jnp.allclose(accel_bf, a_pref, atol=1e-2, rtol=1e-2)

    # Multi-tile path (balanced tiles, grid >= 2, batch padding).
    x_big = jax.random.normal(k_x2, (20, INPUT_DIM), dtype=jnp.float32)
    s_big, a_big = dqn_forward(x_big, packed_f32, output_dim=OUTPUT_DIM,
                               block_batch=16)
    jax.block_until_ready((s_big, a_big))
    s_big_ref, a_big_ref = dqn_forward_torch_ref(x_big, raw)
    assert s_big.shape == (20, OUTPUT_DIM // 2)
    assert jnp.allclose(s_big, s_big_ref, atol=1e-4, rtol=1e-4)
    assert jnp.allclose(a_big, a_big_ref, atol=1e-4, rtol=1e-4)

    # 1-D (single state) input path, like the PyTorch forward.
    s1, a1 = dqn_forward(x[0], packed_f32, output_dim=OUTPUT_DIM)
    jax.block_until_ready((s1, a1))
    assert s1.shape == (OUTPUT_DIM // 2,)
    assert jnp.allclose(s1, s_ref[0], atol=1e-4, rtol=1e-4)

    print("KERNEL_OK")
</pallas_src>

<mosaic_0001>
module attributes {stable_mosaic.version = 11 : i64} {
  func.func @_dqn_kernel(%arg0: i32, %arg1: memref<8x32xf32, #tpu.memory_space<vmem>>, %arg2: memref<32x32xf32, #tpu.memory_space<vmem>>, %arg3: memref<32x32xf32, #tpu.memory_space<vmem>>, %arg4: memref<32x32xf32, #tpu.memory_space<vmem>>, %arg5: memref<32x48xf32, #tpu.memory_space<vmem>>, %arg6: memref<48x128xf32, #tpu.memory_space<vmem>>, %arg7: memref<9x32xf32, #tpu.memory_space<vmem>>, %arg8: memref<1x48xf32, #tpu.memory_space<vmem>>, %arg9: memref<1x128xf32, #tpu.memory_space<vmem>>, %arg10: memref<8x128xf32, #tpu.memory_space<vmem>>) attributes {dimension_semantics = [#tpu.dimension_semantics<parallel>], iteration_bounds = array<i64: 1>, scalar_prefetch = 0 : i64, scratch_operands = 0 : i64, tpu.core_type = #tpu.core_type<tc>, window_params = [{transform_indices = @transform_0, window_bounds = array<i64: 8, 32>}, {pipeline_mode = #tpu.pipeline_mode<synchronous>, transform_indices = @transform_1, window_bounds = array<i64: 32, 32>}, {pipeline_mode = #tpu.pipeline_mode<synchronous>, transform_indices = @transform_2, window_bounds = array<i64: 32, 32>}, {pipeline_mode = #tpu.pipeline_mode<synchronous>, transform_indices = @transform_3, window_bounds = array<i64: 32, 32>}, {pipeline_mode = #tpu.pipeline_mode<synchronous>, transform_indices = @transform_4, window_bounds = array<i64: 32, 48>}, {pipeline_mode = #tpu.pipeline_mode<synchronous>, transform_indices = @transform_5, window_bounds = array<i64: 48, 128>}, {pipeline_mode = #tpu.pipeline_mode<synchronous>, transform_indices = @transform_6, window_bounds = array<i64: 9, 32>}, {pipeline_mode = #tpu.pipeline_mode<synchronous>, transform_indices = @transform_7, window_bounds = array<i64: 1, 48>}, {pipeline_mode = #tpu.pipeline_mode<synchronous>, transform_indices = @transform_8, window_bounds = array<i64: 1, 128>}, {transform_indices = @transform_9, window_bounds = array<i64: 8, 128>}]} {
    %c0 = arith.constant 0 : index
    %c0_0 = arith.constant 0 : index
    %0 = vector.load %arg1[%c0, %c0_0] : memref<8x32xf32, #tpu.memory_space<vmem>>, vector<8x32xf32>
    %c0_1 = arith.constant 0 : index
    %c0_2 = arith.constant 0 : index
    %1 = vector.load %arg7[%c0_1, %c0_2] : memref<9x32xf32, #tpu.memory_space<vmem>>, vector<9x32xf32>
    %2 = vector.extract_strided_slice %1 {offsets = [0, 0], sizes = [1, 32], strides = [1, 1]} : vector<9x32xf32> to vector<1x32xf32>
    %3 = vector.extract_strided_slice %1 {offsets = [1, 0], sizes = [1, 32], strides = [1, 1]} : vector<9x32xf32> to vector<1x32xf32>
    %4 = vector.extract_strided_slice %1 {offsets = [2, 0], sizes = [1, 32], strides = [1, 1]} : vector<9x32xf32> to vector<1x32xf32>
    %5 = vector.extract_strided_slice %1 {offsets = [3, 0], sizes = [1, 32], strides = [1, 1]} : vector<9x32xf32> to vector<1x32xf32>
    %6 = vector.extract_strided_slice %1 {offsets = [4, 0], sizes = [1, 32], strides = [1, 1]} : vector<9x32xf32> to vector<1x32xf32>
    %7 = vector.extract_strided_slice %1 {offsets = [5, 0], sizes = [1, 32], strides = [1, 1]} : vector<9x32xf32> to vector<1x32xf32>
    %8 = vector.extract_strided_slice %1 {offsets = [6, 0], sizes = [1, 32], strides = [1, 1]} : vector<9x32xf32> to vector<1x32xf32>
    %9 = vector.extract_strided_slice %1 {offsets = [7, 0], sizes = [1, 32], strides = [1, 1]} : vector<9x32xf32> to vector<1x32xf32>
    %10 = vector.extract_strided_slice %1 {offsets = [8, 0], sizes = [1, 32], strides = [1, 1]} : vector<9x32xf32> to vector<1x32xf32>
    %c0_3 = arith.constant 0 : index
    %c0_4 = arith.constant 0 : index
    %11 = vector.load %arg2[%c0_3, %c0_4] : memref<32x32xf32, #tpu.memory_space<vmem>>, vector<32x32xf32>
    %cst = arith.constant dense<0.000000e+00> : vector<8x32xf32>
    %12 = tpu.matmul %0, %11, %cst {dimension_numbers = #tpu.dot_dimension_numbers<[1], [0], [0], [1], [0, 0, 1, 1], [], []>} : vector<8x32xf32>, vector<32x32xf32>, vector<8x32xf32> -> vector<8x32xf32>
    %13 = vector.broadcast %2 : vector<1x32xf32> to vector<8x32xf32>
    %14 = arith.addf %12, %13 : vector<8x32xf32>
    %15 = vector.extract_strided_slice %14 {offsets = [0, 0], sizes = [8, 1], strides = [1, 1]} : vector<8x32xf32> to vector<8x1xf32>
    %16 = vector.broadcast %15 : vector<8x1xf32> to vector<8x32xf32>
    %17 = arith.subf %14, %16 : vector<8x32xf32>
    %cst_5 = arith.constant dense<0.000000e+00> : vector<8xf32>
    %18 = vector.multi_reduction <add>, %17, %cst_5 [1] : vector<8x32xf32> to vector<8xf32>
    %19 = vector.shape_cast %18 : vector<8xf32> to vector<8x1xf32>
    %cst_6 = arith.constant 3.200000e+01 : f32
    %20 = vector.broadcast %cst_6 : f32 to vector<8x1xf32>
    %21 = arith.divf %19, %20 : vector<8x1xf32>
    %22 = arith.mulf %17, %17 : vector<8x32xf32>
    %cst_7 = arith.constant dense<0.000000e+00> : vector<8xf32>
    %23 = vector.multi_reduction <add>, %22, %cst_7 [1] : vector<8x32xf32> to vector<8xf32>
    %24 = vector.shape_cast %23 : vector<8xf32> to vector<8x1xf32>
    %cst_8 = arith.constant 3.200000e+01 : f32
    %25 = vector.broadcast %cst_8 : f32 to vector<8x1xf32>
    %26 = arith.divf %24, %25 : vector<8x1xf32>
    %27 = arith.mulf %21, %21 : vector<8x1xf32>
    %28 = arith.subf %26, %27 : vector<8x1xf32>
    %29 = vector.broadcast %21 : vector<8x1xf32> to vector<8x32xf32>
    %30 = arith.subf %17, %29 : vector<8x32xf32>
    %cst_9 = arith.constant 9.99999974E-6 : f32
    %31 = vector.broadcast %cst_9 : f32 to vector<8x1xf32>
    %32 = arith.addf %28, %31 : vector<8x1xf32>
    %33 = math.rsqrt %32 : vector<8x1xf32>
    %34 = vector.broadcast %33 : vector<8x1xf32> to vector<8x32xf32>
    %35 = arith.mulf %30, %34 : vector<8x32xf32>
    %36 = vector.broadcast %3 : vector<1x32xf32> to vector<8x32xf32>
    %37 = arith.mulf %35, %36 : vector<8x32xf32>
    %38 = vector.broadcast %4 : vector<1x32xf32> to vector<8x32xf32>
    %39 = arith.addf %37, %38 : vector<8x32xf32>
    %cst_10 = arith.constant 0.000000e+00 : f32
    %40 = vector.broadcast %cst_10 : f32 to vector<8x32xf32>
    %41 = arith.maximumf %39, %40 : vector<8x32xf32>
    %c0_11 = arith.constant 0 : index
    %c0_12 = arith.constant 0 : index
    %42 = vector.load %arg3[%c0_11, %c0_12] : memref<32x32xf32, #tpu.memory_space<vmem>>, vector<32x32xf32>
    %cst_13 = arith.constant dense<0.000000e+00> : vector<8x32xf32>
    %43 = tpu.matmul %41, %42, %cst_13 {dimension_numbers = #tpu.dot_dimension_numbers<[1], [0], [0], [1], [0, 0, 1, 1], [], []>} : vector<8x32xf32>, vector<32x32xf32>, vector<8x32xf32> -> vector<8x32xf32>
    %44 = vector.broadcast %5 : vector<1x32xf32> to vector<8x32xf32>
    %45 = arith.addf %43, %44 : vector<8x32xf32>
    %46 = vector.extract_strided_slice %45 {offsets = [0, 0], sizes = [8, 1], strides = [1, 1]} : vector<8x32xf32> to vector<8x1xf32>
    %47 = vector.broadcast %46 : vector<8x1xf32> to vector<8x32xf32>
    %48 = arith.subf %45, %47 : vector<8x32xf32>
    %cst_14 = arith.constant dense<0.000000e+00> : vector<8xf32>
    %49 = vector.multi_reduction <add>, %48, %cst_14 [1] : vector<8x32xf32> to vector<8xf32>
    %50 = vector.shape_cast %49 : vector<8xf32> to vector<8x1xf32>
    %cst_15 = arith.constant 3.200000e+01 : f32
    %51 = vector.broadcast %cst_15 : f32 to vector<8x1xf32>
    %52 = arith.divf %50, %51 : vector<8x1xf32>
    %53 = arith.mulf %48, %48 : vector<8x32xf32>
    %cst_16 = arith.constant dense<0.000000e+00> : vector<8xf32>
    %54 = vector.multi_reduction <add>, %53, %cst_16 [1] : vector<8x32xf32> to vector<8xf32>
    %55 = vector.shape_cast %54 : vector<8xf32> to vector<8x1xf32>
    %cst_17 = arith.constant 3.200000e+01 : f32
    %56 = vector.broadcast %cst_17 : f32 to vector<8x1xf32>
    %57 = arith.divf %55, %56 : vector<8x1xf32>
    %58 = arith.mulf %52, %52 : vector<8x1xf32>
    %59 = arith.subf %57, %58 : vector<8x1xf32>
    %60 = vector.broadcast %52 : vector<8x1xf32> to vector<8x32xf32>
    %61 = arith.subf %48, %60 : vector<8x32xf32>
    %cst_18 = arith.constant 9.99999974E-6 : f32
    %62 = vector.broadcast %cst_18 : f32 to vector<8x1xf32>
    %63 = arith.addf %59, %62 : vector<8x1xf32>
    %64 = math.rsqrt %63 : vector<8x1xf32>
    %65 = vector.broadcast %64 : vector<8x1xf32> to vector<8x32xf32>
    %66 = arith.mulf %61, %65 : vector<8x32xf32>
    %67 = vector.broadcast %6 : vector<1x32xf32> to vector<8x32xf32>
    %68 = arith.mulf %66, %67 : vector<8x32xf32>
    %69 = vector.broadcast %7 : vector<1x32xf32> to vector<8x32xf32>
    %70 = arith.addf %68, %69 : vector<8x32xf32>
    %cst_19 = arith.constant 0.000000e+00 : f32
    %71 = vector.broadcast %cst_19 : f32 to vector<8x32xf32>
    %72 = arith.maximumf %70, %71 : vector<8x32xf32>
    %c0_20 = arith.constant 0 : index
    %c0_21 = arith.constant 0 : index
    %73 = vector.load %arg4[%c0_20, %c0_21] : memref<32x32xf32, #tpu.memory_space<vmem>>, vector<32x32xf32>
    %cst_22 = arith.constant dense<0.000000e+00> : vector<8x32xf32>
    %74 = tpu.matmul %72, %73, %cst_22 {dimension_numbers = #tpu.dot_dimension_numbers<[1], [0], [0], [1], [0, 0, 1, 1], [], []>} : vector<8x32xf32>, vector<32x32xf32>, vector<8x32xf32> -> vector<8x32xf32>
    %75 = vector.broadcast %8 : vector<1x32xf32> to vector<8x32xf32>
    %76 = arith.addf %74, %75 : vector<8x32xf32>
    %77 = arith.addf %76, %41 : vector<8x32xf32>
    %78 = vector.extract_strided_slice %77 {offsets = [0, 0], sizes = [8, 1], strides = [1, 1]} : vector<8x32xf32> to vector<8x1xf32>
    %79 = vector.broadcast %78 : vector<8x1xf32> to vector<8x32xf32>
    %80 = arith.subf %77, %79 : vector<8x32xf32>
    %cst_23 = arith.constant dense<0.000000e+00> : vector<8xf32>
    %81 = vector.multi_reduction <add>, %80, %cst_23 [1] : vector<8x32xf32> to vector<8xf32>
    %82 = vector.shape_cast %81 : vector<8xf32> to vector<8x1xf32>
    %cst_24 = arith.constant 3.200000e+01 : f32
    %83 = vector.broadcast %cst_24 : f32 to vector<8x1xf32>
    %84 = arith.divf %82, %83 : vector<8x1xf32>
    %85 = arith.mulf %80, %80 : vector<8x32xf32>
    %cst_25 = arith.constant dense<0.000000e+00> : vector<8xf32>
    %86 = vector.multi_reduction <add>, %85, %cst_25 [1] : vector<8x32xf32> to vector<8xf32>
    %87 = vector.shape_cast %86 : vector<8xf32> to vector<8x1xf32>
    %cst_26 = arith.constant 3.200000e+01 : f32
    %88 = vector.broadcast %cst_26 : f32 to vector<8x1xf32>
    %89 = arith.divf %87, %88 : vector<8x1xf32>
    %90 = arith.mulf %84, %84 : vector<8x1xf32>
    %91 = arith.subf %89, %90 : vector<8x1xf32>
    %92 = vector.broadcast %84 : vector<8x1xf32> to vector<8x32xf32>
    %93 = arith.subf %80, %92 : vector<8x32xf32>
    %cst_27 = arith.constant 9.99999974E-6 : f32
    %94 = vector.broadcast %cst_27 : f32 to vector<8x1xf32>
    %95 = arith.addf %91, %94 : vector<8x1xf32>
    %96 = math.rsqrt %95 : vector<8x1xf32>
    %97 = vector.broadcast %96 : vector<8x1xf32> to vector<8x32xf32>
    %98 = arith.mulf %93, %97 : vector<8x32xf32>
    %99 = vector.broadcast %9 : vector<1x32xf32> to vector<8x32xf32>
    %100 = arith.mulf %98, %99 : vector<8x32xf32>
    %101 = vector.broadcast %10 : vector<1x32xf32> to vector<8x32xf32>
    %102 = arith.addf %100, %101 : vector<8x32xf32>
    %cst_28 = arith.constant 0.000000e+00 : f32
    %103 = vector.broadcast %cst_28 : f32 to vector<8x32xf32>
    %104 = arith.maximumf %102, %103 : vector<8x32xf32>
    %c0_29 = arith.constant 0 : index
    %c0_30 = arith.constant 0 : index
    %105 = vector.load %arg8[%c0_29, %c0_30] : memref<1x48xf32, #tpu.memory_space<vmem>>, vector<1x48xf32>
    %c0_31 = arith.constant 0 : index
    %c0_32 = arith.constant 0 : index
    %106 = vector.load %arg5[%c0_31, %c0_32] : memref<32x48xf32, #tpu.memory_space<vmem>>, vector<32x48xf32>
    %cst_33 = arith.constant dense<0.000000e+00> : vector<8x48xf32>
    %107 = tpu.matmul %104, %106, %cst_33 {dimension_numbers = #tpu.dot_dimension_numbers<[1], [0], [0], [1], [0, 0, 1, 1], [], []>} : vector<8x32xf32>, vector<32x48xf32>, vector<8x48xf32> -> vector<8x48xf32>
    %108 = vector.broadcast %105 : vector<1x48xf32> to vector<8x48xf32>
    %109 = arith.addf %107, %108 : vector<8x48xf32>
    %cst_34 = arith.constant 0.000000e+00 : f32
    %110 = vector.broadcast %cst_34 : f32 to vector<8x48xf32>
    %111 = arith.maximumf %109, %110 : vector<8x48xf32>
    %c0_35 = arith.constant 0 : index
    %c0_36 = arith.constant 0 : index
    %112 = vector.load %arg9[%c0_35, %c0_36] : memref<1x128xf32, #tpu.memory_space<vmem>>, vector<1x128xf32>
    %c0_37 = arith.constant 0 : index
    %c0_38 = arith.constant 0 : index
    %113 = vector.load %arg6[%c0_37, %c0_38] : memref<48x128xf32, #tpu.memory_space<vmem>>, vector<48x128xf32>
    %cst_39 = arith.constant dense<0.000000e+00> : vector<8x128xf32>
    %114 = tpu.matmul %111, %113, %cst_39 {dimension_numbers = #tpu.dot_dimension_numbers<[1], [0], [0], [1], [0, 0, 1, 1], [], []>} : vector<8x48xf32>, vector<48x128xf32>, vector<8x128xf32> -> vector<8x128xf32>
    %115 = vector.broadcast %112 : vector<1x128xf32> to vector<8x128xf32>
    %116 = arith.addf %114, %115 : vector<8x128xf32>
    %c0_40 = arith.constant 0 : index
    %c0_41 = arith.constant 0 : index
    %117 = vector.load %arg10[%c0_40, %c0_41] : memref<8x128xf32, #tpu.memory_space<vmem>>, vector<8x128xf32>
    tpu.vector_store %arg10[%c0_40, %c0_41], %116 {strides = array<i32>} : memref<8x128xf32, #tpu.memory_space<vmem>>, vector<8x128xf32>,
    return
  }
  func.func @transform_0(%arg0: i32) -> (i32, i32) {
    %c0_i32 = arith.constant 0 : i32
    %c0_i32_0 = arith.constant 0 : i32
    return %arg0, %c0_i32 : i32, i32
  }
  func.func @transform_1(%arg0: i32) -> (i32, i32) {
    %c0_i32 = arith.constant 0 : i32
    %c0_i32_0 = arith.constant 0 : i32
    %c0_i32_1 = arith.constant 0 : i32
    return %c0_i32, %c0_i32_0 : i32, i32
  }
  func.func @transform_2(%arg0: i32) -> (i32, i32) {
    %c0_i32 = arith.constant 0 : i32
    %c0_i32_0 = arith.constant 0 : i32
    %c0_i32_1 = arith.constant 0 : i32
    return %c0_i32, %c0_i32_0 : i32, i32
  }
  func.func @transform_3(%arg0: i32) -> (i32, i32) {
    %c0_i32 = arith.constant 0 : i32
    %c0_i32_0 = arith.constant 0 : i32
    %c0_i32_1 = arith.constant 0 : i32
    return %c0_i32, %c0_i32_0 : i32, i32
  }
  func.func @transform_4(%arg0: i32) -> (i32, i32) {
    %c0_i32 = arith.constant 0 : i32
    %c0_i32_0 = arith.constant 0 : i32
    %c0_i32_1 = arith.constant 0 : i32
    return %c0_i32, %c0_i32_0 : i32, i32
  }
  func.func @transform_5(%arg0: i32) -> (i32, i32) {
    %c0_i32 = arith.constant 0 : i32
    %c0_i32_0 = arith.constant 0 : i32
    %c0_i32_1 = arith.constant 0 : i32
    return %c0_i32, %c0_i32_0 : i32, i32
  }
  func.func @transform_6(%arg0: i32) -> (i32, i32) {
    %c0_i32 = arith.constant 0 : i32
    %c0_i32_0 = arith.constant 0 : i32
    %c0_i32_1 = arith.constant 0 : i32
    return %c0_i32, %c0_i32_0 : i32, i32
  }
  func.func @transform_7(%arg0: i32) -> (i32, i32) {
    %c0_i32 = arith.constant 0 : i32
    %c0_i32_0 = arith.constant 0 : i32
    %c0_i32_1 = arith.constant 0 : i32
    return %c0_i32, %c0_i32_0 : i32, i32
  }
  func.func @transform_8(%arg0: i32) -> (i32, i32) {
    %c0_i32 = arith.constant 0 : i32
    %c0_i32_0 = arith.constant 0 : i32
    %c0_i32_1 = arith.constant 0 : i32
    return %c0_i32, %c0_i32_0 : i32, i32
  }
  func.func @transform_9(%arg0: i32) -> (i32, i32) {
    %c0_i32 = arith.constant 0 : i32
    %c0_i32_0 = arith.constant 0 : i32
    return %arg0, %c0_i32 : i32, i32
  }
}

</mosaic_0001>

<llo_original>
// kernel: dqn_forward.1
$region0: #{dqn_forward.1}
  #allocation0 [shape = 'u32[]', space=smem, size = 0x4, offset = 0x4, fixed_abs, tag = 'smem constant byte address 0x4 - core index']
  #allocation1 [shape = 'u32[144,128]{1,0:T(1,128)}', space=vmem, size = 0x12000, scoped, tag = 'internal scratch']
  %s0 = inlined_call_operand.vmem [shape: f32[8,32], index: 0, kind: input, shape index: {}]
  %s1 = inlined_call_operand.hbm [shape: f32[32,32], index: 1, kind: input, shape index: {}]
  %s2 = inlined_call_operand.hbm [shape: f32[32,32], index: 2, kind: input, shape index: {}]
  %s3 = inlined_call_operand.hbm [shape: f32[32,32], index: 3, kind: input, shape index: {}]
  %s4 = inlined_call_operand.hbm [shape: f32[32,48], index: 4, kind: input, shape index: {}]
  %s5 = inlined_call_operand.hbm [shape: f32[48,128], index: 5, kind: input, shape index: {}]
  %s6 = inlined_call_operand.vmem [shape: f32[9,32], index: 6, kind: input, shape index: {}]
  %s7 = inlined_call_operand.vmem [shape: f32[1,48], index: 7, kind: input, shape index: {}]
  %s8 = inlined_call_operand.vmem [shape: f32[1,128], index: 8, kind: input, shape index: {}]
  %s9 = inlined_call_operand.vmem [shape: f32[8,128], index: 9, kind: output, shape index: {}]
  %s10 = sld [smem:[#allocation0]]
  $region66: #{dqn_forward.1} parent=0
    _
  %s12 = ssub.s32 1, %s10
  %s13 = scalar_select 0, %s12, %s10
  $region1: #{dqn_forward.1} parent=0
    #allocation2 [shape = 'u8[16384]{0}', space=vmem, size = 0x4000, scoped, tag = 'input window, operand 1, single buffered']
    #allocation3 [shape = 's32[1]{0}', space=sflag, size = 0x4, scoped, tag = 'scoped memory for dqn_forward.1']
    #allocation4 [shape = 'u8[16384]{0}', space=vmem, size = 0x4000, scoped, tag = 'input window, operand 2, single buffered']
    #allocation5 [shape = 's32[1]{0}', space=sflag, size = 0x4, scoped, tag = 'scoped memory for dqn_forward.1']
    #allocation6 [shape = 'u8[16384]{0}', space=vmem, size = 0x4000, scoped, tag = 'input window, operand 3, single buffered']
    #allocation7 [shape = 'u8[16384]{0}', space=vmem, size = 0x4000, scoped, tag = 'input window, operand 4, single buffered']
    #allocation8 [shape = 's32[1]{0}', space=sflag, size = 0x4, scoped, tag = 'scoped memory for dqn_forward.1']
    #allocation9 [shape = 'u8[24576]{0}', space=vmem, size = 0x6000, scoped, tag = 'input window, operand 5, single buffered']
    %14 = vsyncpa [#allocation3], 0
    %15 = vsyncpa [#allocation5], 0
    %16 = vsyncpa [#allocation8], 0
    // Predicated region
    $region2: #{dqn_forward.1} parent=1 // pred_check
      _
    $region3: #{dqn_forward.1} parent=1 // pred_check_branch
      %18 = sbr.rel (0) target = $region5
    $region4: #{dqn_forward.1} parent=1 // pred_region
      _
    $region5: #{dqn_forward.1} parent=1 // pred_fallthru
      _
    // Predicated region
    $region6: #{dqn_forward.1} parent=1 // pred_check
      _
    $region7: #{dqn_forward.1} parent=1 // pred_check_branch
      %20 = sbr.rel (0) target = $region9
    $region8: #{dqn_forward.1} parent=1 // pred_region
      %s22 = ssub.s32 512, 512
      %23 = vsyncadd [#allocation3], %s22
      %s24 = sshll.u32 [#allocation2], 4
      %s25 = int_to_ptr.vmem [resolvable:$true] %s24
      %30 = dma.hbm_to_vmem [thread:$0]  %s1, 512, %s25, [#allocation3], 128, 128, 8
    $region9: #{dqn_forward.1} parent=1 // pred_fallthru
      _
    // Predicated region
    $region10: #{dqn_forward.1} parent=1 // pred_check
      _
    $region11: #{dqn_forward.1} parent=1 // pred_check_branch
      %32 = sbr.rel (0) target = $region13
    $region12: #{dqn_forward.1} parent=1 // pred_region
      %s34 = ssub.s32 512, 512
      %35 = vsyncadd [#allocation5], %s34
      %s36 = sshll.u32 [#allocation4], 4
      %s37 = int_to_ptr.vmem [resolvable:$true] %s36
      %42 = dma.hbm_to_vmem [thread:$0]  %s2, 512, %s37, [#allocation5], 128, 128, 8
    $region13: #{dqn_forward.1} parent=1 // pred_fallthru
      _
    // Predicated region
    $region14: #{dqn_forward.1} parent=1 // pred_check
      _
    $region15: #{dqn_forward.1} parent=1 // pred_check_branch
      %44 = sbr.rel (0) target = $region17
    $region16: #{dqn_forward.1} parent=1 // pred_region
      %s46 = ssub.s32 512, 512
      %47 = vsyncadd [#allocation5], %s46
      %s48 = sshll.u32 [#allocation6], 4
      %s49 = int_to_ptr.vmem [resolvable:$true] %s48
      %54 = dma.hbm_to_vmem [thread:$0]  %s3, 512, %s49, [#allocation5], 128, 128, 8
    $region17: #{dqn_forward.1} parent=1 // pred_fallthru
      _
    // Predicated region
    $region18: #{dqn_forward.1} parent=1 // pred_check
      _
    $region19: #{dqn_forward.1} parent=1 // pred_check_branch
      %56 = sbr.rel (0) target = $region21
    $region20: #{dqn_forward.1} parent=1 // pred_region
      %s58 = ssub.s32 512, 512
      %59 = vsyncadd [#allocation8], %s58
      %s60 = sshll.u32 [#allocation7], 4
      %s61 = int_to_ptr.vmem [resolvable:$true] %s60
      %66 = dma.hbm_to_vmem [thread:$0]  %s4, 512, %s61, [#allocation8], 128, 128, 8
    $region21: #{dqn_forward.1} parent=1 // pred_fallthru
      _
    // Predicated region
    $region22: #{dqn_forward.1} parent=1 // pred_check
      _
    $region23: #{dqn_forward.1} parent=1 // pred_check_branch
      %68 = sbr.rel (0) target = $region25
    $region24: #{dqn_forward.1} parent=1 // pred_region
      %s70 = ssub.s32 768, 768
      %71 = vsyncadd [#allocation8], %s70
      %s72 = sshll.u32 [#allocation9], 4
      %s73 = int_to_ptr.vmem [resolvable:$true] %s72
      %78 = dma.hbm_to_vmem [thread:$0]  %s5, 768, %s73, [#allocation8], 128, 128, 8
    $region25: #{dqn_forward.1} parent=1 // pred_fallthru
      _
    // Predicated region
    $region26: #{dqn_forward.1} parent=1 // pred_check
      _
    $region27: #{dqn_forward.1} parent=1 // pred_check_branch
      %80 = sbr.rel (0) target = $region29
    $region28: #{dqn_forward.1} parent=1 // pred_region
      _
    $region29: #{dqn_forward.1} parent=1 // pred_fallthru
      _
    // Predicated region
    $region30: #{dqn_forward.1} parent=1 // pred_check
      _
    $region31: #{dqn_forward.1} parent=1 // pred_check_branch
      %82 = sbr.rel (0) target = $region33
    $region32: #{dqn_forward.1} parent=1 // pred_region
      _
    $region33: #{dqn_forward.1} parent=1 // pred_fallthru
      _
    // Predicated region
    $region34: #{dqn_forward.1} parent=1 // pred_check
      _
    $region35: #{dqn_forward.1} parent=1 // pred_check_branch
      %84 = sbr.rel (0) target = $region37
    $region36: #{dqn_forward.1} parent=1 // pred_region
      _
    $region37: #{dqn_forward.1} parent=1 // pred_fallthru
      _
    // Predicated region
    $region38: #{dqn_forward.1} parent=1 // pred_check
      _
    $region39: #{dqn_forward.1} parent=1 // pred_check_branch
      %86 = sbr.rel (0) target = $region41
    $region40: #{dqn_forward.1} parent=1 // pred_region
      %87 = dma.done [#allocation3], 512
    $region41: #{dqn_forward.1} parent=1 // pred_fallthru
      _
    // Predicated region
    $region42: #{dqn_forward.1} parent=1 // pred_check
      _
    $region43: #{dqn_forward.1} parent=1 // pred_check_branch
      %89 = sbr.rel (0) target = $region45
    $region44: #{dqn_forward.1} parent=1 // pred_region
      %90 = dma.done [#allocation5], 512
    $region45: #{dqn_forward.1} parent=1 // pred_fallthru
      _
    // Predicated region
    $region46: #{dqn_forward.1} parent=1 // pred_check
      _
    $region47: #{dqn_forward.1} parent=1 // pred_check_branch
      %92 = sbr.rel (0) target = $region49
    $region48: #{dqn_forward.1} parent=1 // pred_region
      %93 = dma.done [#allocation5], 512
    $region49: #{dqn_forward.1} parent=1 // pred_fallthru
      _
    // Predicated region
    $region50: #{dqn_forward.1} parent=1 // pred_check
      _
    $region51: #{dqn_forward.1} parent=1 // pred_check_branch
      %95 = sbr.rel (0) target = $region53
    $region52: #{dqn_forward.1} parent=1 // pred_region
      %96 = dma.done [#allocation8], 512
    $region53: #{dqn_forward.1} parent=1 // pred_fallthru
      _
    // Predicated region
    $region54: #{dqn_forward.1} parent=1 // pred_check
      _
    $region55: #{dqn_forward.1} parent=1 // pred_check_branch
      %98 = sbr.rel (0) target = $region57
    $region56: #{dqn_forward.1} parent=1 // pred_region
      %99 = dma.done [#allocation8], 768
    $region57: #{dqn_forward.1} parent=1 // pred_fallthru
      _
    %v100 = vld [vmem:[%s0] sm:$0xff]
    %v101 = vld [vmem:[%s6] sm:$0xff]
    %v102 = vld [vmem:[%s6 + $0x8] sm:$0x1]
    %v103 = vld [vmem:[#allocation2] sm:$0xff]
    %v104 = vld [vmem:[#allocation2 + $0x8] sm:$0xff]
    %v105 = vld [vmem:[#allocation2 + $0x10] sm:$0xff]
    %v106 = vld [vmem:[#allocation2 + $0x18] sm:$0xff]
    %v107 = vlaneseq
    %v108 = vshrl.u32 %v107, 7
    %v109 = vsub.s32 0, %v108
    %v110 = vrot.slane %v101, %v109
    %vm111 = vcmask 261120
    %v113 = vsel %vm111, %v100, 0
    %115 = vmatprep.subr.mxu0 0.0
    %116 = vmatpush1.msra.mxu0 %v103
    %117 = vmatprep.subr.mxu0 0.0
    %118 = vmatpush1.msra.mxu0 %v104
    %119 = vmatprep.subr.mxu0 0.0
    %120 = vmatpush1.msra.mxu0 %v105
    %121 = vmatprep.subr.mxu0 0.0
    %122 = vmatpush1.msra.mxu0 %v106
    %123 = vmatprep.subr.mxu0 0.0
    %124 = vmatpush1.msra.mxu0 0.0
    %125 = vmatprep.subr.mxu0 0.0
    %126 = vmatpush1.msra.mxu0 0.0
    %127 = vmatprep.subr.mxu0 0.0
    %128 = vmatpush1.msra.mxu0 0.0
    %129 = vmatprep.subr.mxu0 0.0
    %130 = vmatpush1.msra.mxu0 0.0
    %131 = vmatprep.subr.mxu0 0.0
    %132 = vmatpush1.msra.mxu0 0.0
    %133 = vmatprep.subr.mxu0 0.0
    %134 = vmatpush1.msra.mxu0 0.0
    %135 = vmatprep.subr.mxu0 0.0
    %136 = vmatpush1.msra.mxu0 0.0
    %137 = vmatprep.subr.mxu0 0.0
    %138 = vmatpush1.msra.mxu0 0.0
    %139 = vmatprep.subr.mxu0 0.0
    %140 = vmatpush1.msra.mxu0 0.0
    %141 = vmatprep.subr.mxu0 0.0
    %142 = vmatpush1.msra.mxu0 0.0
    %143 = vmatprep.subr.mxu0 0.0
    %144 = vmatpush1.msra.mxu0 0.0
    %145 = vmatprep.subr.mxu0 0.0
    %146 = vmatpush1.msra.mxu0 0.0
    %147 = vmatprep.subr.mxu0 0.0
    %148 = vmatpush1.msra.mxu0 0.0
    %149 = vmatprep.subr.mxu0 0.0
    %150 = vmatpush1.msra.mxu0 0.0
    %151 = vmatprep.subr.mxu0 0.0
    %152 = vmatpush1.msra.mxu0 0.0
    %153 = vmatprep.subr.mxu0 0.0
    %154 = vmatpush1.msra.mxu0 0.0
    %155 = vmatprep.subr.mxu0 0.0
    %156 = vmatpush1.msra.mxu0 0.0
    %157 = vmatprep.subr.mxu0 0.0
    %158 = vmatpush1.msra.mxu0 0.0
    %159 = vmatprep.subr.mxu0 0.0
    %160 = vmatpush1.msra.mxu0 0.0
    %161 = vmatprep.subr.mxu0 0.0
    %162 = vmatpush1.msra.mxu0 0.0
    %163 = vmatprep.subr.mxu0 0.0
    %164 = vmatpush1.msra.mxu0 0.0
    %165 = vmatprep.subr.mxu0 0.0
    %166 = vmatpush1.msra.mxu0 0.0
    %167 = vmatprep.subr.mxu0 0.0
    %168 = vmatpush1.msra.mxu0 0.0
    %169 = vmatprep.subr.mxu0 0.0
    %170 = vmatpush1.msra.mxu0 0.0
    %171 = vmatprep.subr.mxu0 0.0
    %172 = vmatpush1.msra.mxu0 0.0
    %173 = vmatprep.subr.mxu0 0.0
    %174 = vmatpush1.msra.mxu0 0.0
    %175 = vmatprep.subr.mxu0 0.0
    %176 = vmatpush1.msra.mxu0 0.0
    %177 = vmatprep.subr.mxu0 0.0
    %178 = vmatpush1.msra.mxu0 0.0
    %179 = vmatprep.mubr.f32.mxu0 0.0
    %180 = vmatmul.mubr.f32.gmra.mrb[0].mxu0 %v113
    %v181 = vpop.f32.mrb[0].mxu0
    %v182 = vadd.f32 %v110, %v181
    %v183 = vpop.f32.mrb[0].mxu0
    %184 = vdwg.mxu0
    %186 = vset.pattern.permute.xlu0 0
    %187 = vperm.xlu0 %186, %v182
    %v188 = vpop.permute.xlu0 %187
    %v190 = vsub.f32 %v182, %v188
    %v191 = vsel %vm111, %v190, 0.0
    %192 = vadd.xlane.f32.xlu0 %v191
    %v193 = vpop.xlane.xlu0 %192
    %v194 = vrcp.pop 32.0
    %v195 = vmul.f32 %v193, %v194
    %v196 = vmul.f32 %v190, %v190
    %v197 = vsel %vm111, %v196, 0.0
    %198 = vadd.xlane.f32.xlu0 %v197
    %v199 = vpop.xlane.xlu0 %198
    %v200 = vmul.f32 %v199, %v194
    %v201 = vmul.f32 %v195, %v195
    %v202 = vsub.f32 %v200, %v201
    %v203 = vsub.f32 %v190, %v195
    %v204 = vadd.f32 %v202, 1e-05
    %v205 = vrsqrt.pop %v204
    %v206 = vmul.f32 %v203, %v205
    %v207 = vlaneseq
    %v208 = vshrl.u32 %v207, 7
    %v209 = vsub.s32 1, %v208
    %v210 = vrot.slane %v101, %v209
    %v211 = vmul.f32 %v206, %v210
    %v212 = vlaneseq
    %v213 = vshrl.u32 %v212, 7
    %v214 = vsub.s32 2, %v213
    %v215 = vrot.slane %v101, %v214
    %v216 = vadd.f32 %v211, %v215
    %v217 = vmax.f32 %v216, 0.0
    %v218 = vld [vmem:[#allocation4] sm:$0xff]
    %v219 = vld [vmem:[#allocation4 + $0x8] sm:$0xff]
    %v220 = vld [vmem:[#allocation4 + $0x10] sm:$0xff]
    %v221 = vld [vmem:[#allocation4 + $0x18] sm:$0xff]
    %v222 = vlaneseq
    %v223 = vshrl.u32 %v222, 7
    %v224 = vsub.s32 3, %v223
    %v225 = vrot.slane %v101, %v224
    %v227 = vsel %vm111, %v217, 0
    %229 = vmatprep.subr.mxu0 0.0
    %230 = vmatpush1.msra.mxu0 %v218
    %231 = vmatprep.subr.mxu0 0.0
    %232 = vmatpush1.msra.mxu0 %v219
    %233 = vmatprep.subr.mxu0 0.0
    %234 = vmatpush1.msra.mxu0 %v220
    %235 = vmatprep.subr.mxu0 0.0
    %236 = vmatpush1.msra.mxu0 %v221
    %237 = vmatprep.subr.mxu0 0.0
    %238 = vmatpush1.msra.mxu0 0.0
    %239 = vmatprep.subr.mxu0 0.0
    %240 = vmatpush1.msra.mxu0 0.0
    %241 = vmatprep.subr.mxu0 0.0
    %242 = vmatpush1.msra.mxu0 0.0
    %243 = vmatprep.subr.mxu0 0.0
    %244 = vmatpush1.msra.mxu0 0.0
    %245 = vmatprep.subr.mxu0 0.0
    %246 = vmatpush1.msra.mxu0 0.0
    %247 = vmatprep.subr.mxu0 0.0
    %248 = vmatpush1.msra.mxu0 0.0
    %249 = vmatprep.subr.mxu0 0.0
    %250 = vmatpush1.msra.mxu0 0.0
    %251 = vmatprep.subr.mxu0 0.0
    %252 = vmatpush1.msra.mxu0 0.0
    %253 = vmatprep.subr.mxu0 0.0
    %254 = vmatpush1.msra.mxu0 0.0
    %255 = vmatprep.subr.mxu0 0.0
    %256 = vmatpush1.msra.mxu0 0.0
    %257 = vmatprep.subr.mxu0 0.0
    %258 = vmatpush1.msra.mxu0 0.0
    %259 = vmatprep.subr.mxu0 0.0
    %260 = vmatpush1.msra.mxu0 0.0
    %261 = vmatprep.subr.mxu0 0.0
    %262 = vmatpush1.msra.mxu0 0.0
    %263 = vmatprep.subr.mxu0 0.0
    %264 = vmatpush1.msra.mxu0 0.0
    %265 = vmatprep.subr.mxu0 0.0
    %266 = vmatpush1.msra.mxu0 0.0
    %267 = vmatprep.subr.mxu0 0.0
    %268 = vmatpush1.msra.mxu0 0.0
    %269 = vmatprep.subr.mxu0 0.0
    %270 = vmatpush1.msra.mxu0 0.0
    %271 = vmatprep.subr.mxu0 0.0
    %272 = vmatpush1.msra.mxu0 0.0
    %273 = vmatprep.subr.mxu0 0.0
    %274 = vmatpush1.msra.mxu0 0.0
    %275 = vmatprep.subr.mxu0 0.0
    %276 = vmatpush1.msra.mxu0 0.0
    %277 = vmatprep.subr.mxu0 0.0
    %278 = vmatpush1.msra.mxu0 0.0
    %279 = vmatprep.subr.mxu0 0.0
    %280 = vmatpush1.msra.mxu0 0.0
    %281 = vmatprep.subr.mxu0 0.0
    %282 = vmatpush1.msra.mxu0 0.0
    %283 = vmatprep.subr.mxu0 0.0
    %284 = vmatpush1.msra.mxu0 0.0
    %285 = vmatprep.subr.mxu0 0.0
    %286 = vmatpush1.msra.mxu0 0.0
    %287 = vmatprep.subr.mxu0 0.0
    %288 = vmatpush1.msra.mxu0 0.0
    %289 = vmatprep.subr.mxu0 0.0
    %290 = vmatpush1.msra.mxu0 0.0
    %291 = vmatprep.subr.mxu0 0.0
    %292 = vmatpush1.msra.mxu0 0.0
    %293 = vmatprep.mubr.f32.mxu0 0.0
    %294 = vmatmul.mubr.f32.gmra.mrb[0].mxu0 %v227
    %v295 = vpop.f32.mrb[0].mxu0
    %v296 = vadd.f32 %v225, %v295
    %v297 = vpop.f32.mrb[0].mxu0
    %298 = vdwg.mxu0
    %300 = vset.pattern.permute.xlu0 0
    %301 = vperm.xlu0 %300, %v296
    %v302 = vpop.permute.xlu0 %301
    %v304 = vsub.f32 %v296, %v302
    %v305 = vsel %vm111, %v304, 0.0
    %306 = vadd.xlane.f32.xlu0 %v305
    %v307 = vpop.xlane.xlu0 %306
    %v308 = vmul.f32 %v307, %v194
    %v309 = vmul.f32 %v304, %v304
    %v310 = vsel %vm111, %v309, 0.0
    %311 = vadd.xlane.f32.xlu0 %v310
    %v312 = vpop.xlane.xlu0 %311
    %v313 = vmul.f32 %v312, %v194
    %v314 = vmul.f32 %v308, %v308
    %v315 = vsub.f32 %v313, %v314
    %v316 = vsub.f32 %v304, %v308
    %v317 = vadd.f32 %v315, 1e-05
    %v318 = vrsqrt.pop %v317
    %v319 = vmul.f32 %v316, %v318
    %v320 = vlaneseq
    %v321 = vshrl.u32 %v320, 7
    %v322 = vsub.s32 4, %v321
    %v323 = vrot.slane %v101, %v322
    %v324 = vmul.f32 %v319, %v323
    %v325 = vlaneseq
    %v326 = vshrl.u32 %v325, 7
    %v327 = vsub.s32 5, %v326
    %v328 = vrot.slane %v101, %v327
    %v329 = vadd.f32 %v324, %v328
    %v330 = vmax.f32 %v329, 0.0
    %v331 = vld [vmem:[#allocation6] sm:$0xff]
    %v332 = vld [vmem:[#allocation6 + $0x8] sm:$0xff]
    %v333 = vld [vmem:[#allocation6 + $0x10] sm:$0xff]
    %v334 = vld [vmem:[#allocation6 + $0x18] sm:$0xff]
    %v335 = vlaneseq
    %v336 = vshrl.u32 %v335, 7
    %v337 = vsub.s32 6, %v336
    %v338 = vrot.slane %v101, %v337
    %v340 = vsel %vm111, %v330, 0
    %342 = vmatprep.subr.mxu0 0.0
    %343 = vmatpush1.msra.mxu0 %v331
    %344 = vmatprep.subr.mxu0 0.0
    %345 = vmatpush1.msra.mxu0 %v332
    %346 = vmatprep.subr.mxu0 0.0
    %347 = vmatpush1.msra.mxu0 %v333
    %348 = vmatprep.subr.mxu0 0.0
    %349 = vmatpush1.msra.mxu0 %v334
    %350 = vmatprep.subr.mxu0 0.0
    %351 = vmatpush1.msra.mxu0 0.0
    %352 = vmatprep.subr.mxu0 0.0
    %353 = vmatpush1.msra.mxu0 0.0
    %354 = vmatprep.subr.mxu0 0.0
    %355 = vmatpush1.msra.mxu0 0.0
    %356 = vmatprep.subr.mxu0 0.0
    %357 = vmatpush1.msra.mxu0 0.0
    %358 = vmatprep.subr.mxu0 0.0
    %359 = vmatpush1.msra.mxu0 0.0
    %360 = vmatprep.subr.mxu0 0.0
    %361 = vmatpush1.msra.mxu0 0.0
    %362 = vmatprep.subr.mxu0 0.0
    %363 = vmatpush1.msra.mxu0 0.0
    %364 = vmatprep.subr.mxu0 0.0
    %365 = vmatpush1.msra.mxu0 0.0
    %366 = vmatprep.subr.mxu0 0.0
    %367 = vmatpush1.msra.mxu0 0.0
    %368 = vmatprep.subr.mxu0 0.0
    %369 = vmatpush1.msra.mxu0 0.0
    %370 = vmatprep.subr.mxu0 0.0
    %371 = vmatpush1.msra.mxu0 0.0
    %372 = vmatprep.subr.mxu0 0.0
    %373 = vmatpush1.msra.mxu0 0.0
    %374 = vmatprep.subr.mxu0 0.0
    %375 = vmatpush1.msra.mxu0 0.0
    %376 = vmatprep.subr.mxu0 0.0
    %377 = vmatpush1.msra.mxu0 0.0
    %378 = vmatprep.subr.mxu0 0.0
    %379 = vmatpush1.msra.mxu0 0.0
    %380 = vmatprep.subr.mxu0 0.0
    %381 = vmatpush1.msra.mxu0 0.0
    %382 = vmatprep.subr.mxu0 0.0
    %383 = vmatpush1.msra.mxu0 0.0
    %384 = vmatprep.subr.mxu0 0.0
    %385 = vmatpush1.msra.mxu0 0.0
    %386 = vmatprep.subr.mxu0 0.0
    %387 = vmatpush1.msra.mxu0 0.0
    %388 = vmatprep.subr.mxu0 0.0
    %389 = vmatpush1.msra.mxu0 0.0
    %390 = vmatprep.subr.mxu0 0.0
    %391 = vmatpush1.msra.mxu0 0.0
    %392 = vmatprep.subr.mxu0 0.0
    %393 = vmatpush1.msra.mxu0 0.0
    %394 = vmatprep.subr.mxu0 0.0
    %395 = vmatpush1.msra.mxu0 0.0
    %396 = vmatprep.subr.mxu0 0.0
    %397 = vmatpush1.msra.mxu0 0.0
    %398 = vmatprep.subr.mxu0 0.0
    %399 = vmatpush1.msra.mxu0 0.0
    %400 = vmatprep.subr.mxu0 0.0
    %401 = vmatpush1.msra.mxu0 0.0
    %402 = vmatprep.subr.mxu0 0.0
    %403 = vmatpush1.msra.mxu0 0.0
    %404 = vmatprep.subr.mxu0 0.0
    %405 = vmatpush1.msra.mxu0 0.0
    %406 = vmatprep.mubr.f32.mxu0 0.0
    %407 = vmatmul.mubr.f32.gmra.mrb[0].mxu0 %v340
    %v408 = vpop.f32.mrb[0].mxu0
    %v409 = vadd.f32 %v338, %v408
    %v410 = vpop.f32.mrb[0].mxu0
    %411 = vdwg.mxu0
    %v412 = vadd.f32 %v409, %v217
    %414 = vset.pattern.permute.xlu0 0
    %415 = vperm.xlu0 %414, %v412
    %v416 = vpop.permute.xlu0 %415
    %v418 = vsub.f32 %v412, %v416
    %v419 = vsel %vm111, %v418, 0.0
    %420 = vadd.xlane.f32.xlu0 %v419
    %v421 = vpop.xlane.xlu0 %420
    %v422 = vmul.f32 %v421, %v194
    %v423 = vmul.f32 %v418, %v418
    %v424 = vsel %vm111, %v423, 0.0
    %425 = vadd.xlane.f32.xlu0 %v424
    %v426 = vpop.xlane.xlu0 %425
    %v427 = vmul.f32 %v426, %v194
    %v428 = vmul.f32 %v422, %v422
    %v429 = vsub.f32 %v427, %v428
    %v430 = vsub.f32 %v418, %v422
    %v431 = vadd.f32 %v429, 1e-05
    %v432 = vrsqrt.pop %v431
    %v433 = vmul.f32 %v430, %v432
    %v434 = vlaneseq
    %v435 = vshrl.u32 %v434, 7
    %v436 = vsub.s32 7, %v435
    %v437 = vrot.slane %v101, %v436
    %v438 = vmul.f32 %v433, %v437
    %v439 = vlaneseq
    %v440 = vshrl.u32 %v439, 7
    %v441 = vsub.s32 0, %v440
    %v442 = vrot.slane %v102, %v441
    %v443 = vadd.f32 %v438, %v442
    %v444 = vmax.f32 %v443, 0.0
    %v445 = vld [vmem:[%s7] sm:$0x1]
    %v446 = vld [vmem:[#allocation7] sm:$0xff]
    %v447 = vld [vmem:[#allocation7 + $0x8] sm:$0xff]
    %v448 = vld [vmem:[#allocation7 + $0x10] sm:$0xff]
    %v449 = vld [vmem:[#allocation7 + $0x18] sm:$0xff]
    %v451 = vlaneseq
    %v452 = vshrl.u32 %v451, 7
    %v453 = vsub.s32 0, %v452
    %v454 = vrot.slane %v445, %v453
    %v457 = vsel %vm111, %v444, 0
    %459 = vmatprep.subr.mxu0 0.0
    %460 = vmatpush1.msra.mxu0 %v446
    %461 = vmatprep.subr.mxu0 0.0
    %462 = vmatpush1.msra.mxu0 %v447
    %463 = vmatprep.subr.mxu0 0.0
    %464 = vmatpush1.msra.mxu0 %v448
    %465 = vmatprep.subr.mxu0 0.0
    %466 = vmatpush1.msra.mxu0 %v449
    %467 = vmatprep.subr.mxu0 0.0
    %468 = vmatpush1.msra.mxu0 0.0
    %469 = vmatprep.subr.mxu0 0.0
    %470 = vmatpush1.msra.mxu0 0.0
    %471 = vmatprep.subr.mxu0 0.0
    %472 = vmatpush1.msra.mxu0 0.0
    %473 = vmatprep.subr.mxu0 0.0
    %474 = vmatpush1.msra.mxu0 0.0
    %475 = vmatprep.subr.mxu0 0.0
    %476 = vmatpush1.msra.mxu0 0.0
    %477 = vmatprep.subr.mxu0 0.0
    %478 = vmatpush1.msra.mxu0 0.0
    %479 = vmatprep.subr.mxu0 0.0
    %480 = vmatpush1.msra.mxu0 0.0
    %481 = vmatprep.subr.mxu0 0.0
    %482 = vmatpush1.msra.mxu0 0.0
    %483 = vmatprep.subr.mxu0 0.0
    %484 = vmatpush1.msra.mxu0 0.0
    %485 = vmatprep.subr.mxu0 0.0
    %486 = vmatpush1.msra.mxu0 0.0
    %487 = vmatprep.subr.mxu0 0.0
    %488 = vmatpush1.msra.mxu0 0.0
    %489 = vmatprep.subr.mxu0 0.0
    %490 = vmatpush1.msra.mxu0 0.0
    %491 = vmatprep.subr.mxu0 0.0
    %492 = vmatpush1.msra.mxu0 0.0
    %493 = vmatprep.subr.mxu0 0.0
    %494 = vmatpush1.msra.mxu0 0.0
    %495 = vmatprep.subr.mxu0 0.0
    %496 = vmatpush1.msra.mxu0 0.0
    %497 = vmatprep.subr.mxu0 0.0
    %498 = vmatpush1.msra.mxu0 0.0
    %499 = vmatprep.subr.mxu0 0.0
    %500 = vmatpush1.msra.mxu0 0.0
    %501 = vmatprep.subr.mxu0 0.0
    %502 = vmatpush1.msra.mxu0 0.0
    %503 = vmatprep.subr.mxu0 0.0
    %504 = vmatpush1.msra.mxu0 0.0
    %505 = vmatprep.subr.mxu0 0.0
    %506 = vmatpush1.msra.mxu0 0.0
    %507 = vmatprep.subr.mxu0 0.0
    %508 = vmatpush1.msra.mxu0 0.0
    %509 = vmatprep.subr.mxu0 0.0
    %510 = vmatpush1.msra.mxu0 0.0
    %511 = vmatprep.subr.mxu0 0.0
    %512 = vmatpush1.msra.mxu0 0.0
    %513 = vmatprep.subr.mxu0 0.0
    %514 = vmatpush1.msra.mxu0 0.0
    %515 = vmatprep.subr.mxu0 0.0
    %516 = vmatpush1.msra.mxu0 0.0
    %517 = vmatprep.subr.mxu0 0.0
    %518 = vmatpush1.msra.mxu0 0.0
    %519 = vmatprep.subr.mxu0 0.0
    %520 = vmatpush1.msra.mxu0 0.0
    %521 = vmatprep.subr.mxu0 0.0
    %522 = vmatpush1.msra.mxu0 0.0
    %523 = vmatprep.mubr.f32.mxu0 0.0
    %524 = vmatmul.mubr.f32.gmra.mrb[0].mxu0 %v457
    %v525 = vpop.f32.mrb[0].mxu0
    %v526 = vadd.f32 %v454, %v525
    %v527 = vpop.f32.mrb[0].mxu0
    %528 = vdwg.mxu0
    %v529 = vmax.f32 %v526, 0.0
    %v530 = vld [vmem:[%s8] sm:$0x1]
    %v531 = vld [vmem:[#allocation9] sm:$0xff]
    %v532 = vld [vmem:[#allocation9 + $0x8] sm:$0xff]
    %v533 = vld [vmem:[#allocation9 + $0x10] sm:$0xff]
    %v534 = vld [vmem:[#allocation9 + $0x18] sm:$0xff]
    %v535 = vld [vmem:[#allocation9 + $0x20] sm:$0xff]
    %v536 = vld [vmem:[#allocation9 + $0x28] sm:$0xff]
    %v538 = vlaneseq
    %v539 = vshrl.u32 %v538, 7
    %v540 = vsub.s32 0, %v539
    %v541 = vrot.slane %v530, %v540
    %vm543 = vcmask 392192
    %v545 = vsel %vm543, %v529, 0
    %547 = vmatprep.subr.mxu0 0.0
    %548 = vmatpush1.msra.mxu0 %v531
    %549 = vmatprep.subr.mxu0 0.0
    %550 = vmatpush1.msra.mxu0 %v532
    %551 = vmatprep.subr.mxu0 0.0
    %552 = vmatpush1.msra.mxu0 %v533
    %553 = vmatprep.subr.mxu0 0.0
    %554 = vmatpush1.msra.mxu0 %v534
    %555 = vmatprep.subr.mxu0 0.0
    %556 = vmatpush1.msra.mxu0 %v535
    %557 = vmatprep.subr.mxu0 0.0
    %558 = vmatpush1.msra.mxu0 %v536
    %559 = vmatprep.subr.mxu0 0.0
    %560 = vmatpush1.msra.mxu0 0.0
    %561 = vmatprep.subr.mxu0 0.0
    %562 = vmatpush1.msra.mxu0 0.0
    %563 = vmatprep.subr.mxu0 0.0
    %564 = vmatpush1.msra.mxu0 0.0
    %565 = vmatprep.subr.mxu0 0.0
    %566 = vmatpush1.msra.mxu0 0.0
    %567 = vmatprep.subr.mxu0 0.0
    %568 = vmatpush1.msra.mxu0 0.0
    %569 = vmatprep.subr.mxu0 0.0
    %570 = vmatpush1.msra.mxu0 0.0
    %571 = vmatprep.subr.mxu0 0.0
    %572 = vmatpush1.msra.mxu0 0.0
    %573 = vmatprep.subr.mxu0 0.0
    %574 = vmatpush1.msra.mxu0 0.0
    %575 = vmatprep.subr.mxu0 0.0
    %576 = vmatpush1.msra.mxu0 0.0
    %577 = vmatprep.subr.mxu0 0.0
    %578 = vmatpush1.msra.mxu0 0.0
    %579 = vmatprep.subr.mxu0 0.0
    %580 = vmatpush1.msra.mxu0 0.0
    %581 = vmatprep.subr.mxu0 0.0
    %582 = vmatpush1.msra.mxu0 0.0
    %583 = vmatprep.subr.mxu0 0.0
    %584 = vmatpush1.msra.mxu0 0.0
    %585 = vmatprep.subr.mxu0 0.0
    %586 = vmatpush1.msra.mxu0 0.0
    %587 = vmatprep.subr.mxu0 0.0
    %588 = vmatpush1.msra.mxu0 0.0
    %589 = vmatprep.subr.mxu0 0.0
    %590 = vmatpush1.msra.mxu0 0.0
    %591 = vmatprep.subr.mxu0 0.0
    %592 = vmatpush1.msra.mxu0 0.0
    %593 = vmatprep.subr.mxu0 0.0
    %594 = vmatpush1.msra.mxu0 0.0
    %595 = vmatprep.subr.mxu0 0.0
    %596 = vmatpush1.msra.mxu0 0.0
    %597 = vmatprep.subr.mxu0 0.0
    %598 = vmatpush1.msra.mxu0 0.0
    %599 = vmatprep.subr.mxu0 0.0
    %600 = vmatpush1.msra.mxu0 0.0
    %601 = vmatprep.subr.mxu0 0.0
    %602 = vmatpush1.msra.mxu0 0.0
    %603 = vmatprep.subr.mxu0 0.0
    %604 = vmatpush1.msra.mxu0 0.0
    %605 = vmatprep.subr.mxu0 0.0
    %606 = vmatpush1.msra.mxu0 0.0
    %607 = vmatprep.subr.mxu0 0.0
    %608 = vmatpush1.msra.mxu0 0.0
    %609 = vmatprep.subr.mxu0 0.0
    %610 = vmatpush1.msra.mxu0 0.0
    %611 = vmatprep.mubr.f32.mxu0 0.0
    %612 = vmatmul.mubr.f32.gmra.mrb[0].mxu0 %v545
    %v613 = vpop.f32.mrb[0].mxu0
    %v614 = vadd.f32 %v541, %v613
    %v615 = vpop.f32.mrb[0].mxu0
    %616 = vdwg.mxu0
    %617 = vst [vmem:[%s9] sm:$0xff] %v614
    // Predicated region
    $region58: #{dqn_forward.1} parent=1 // pred_check
      _
    $region59: #{dqn_forward.1} parent=1 // pred_check_branch
      %619 = sbr.rel (0) target = $region61
    $region60: #{dqn_forward.1} parent=1 // pred_region
      _
    $region61: #{dqn_forward.1} parent=1 // pred_fallthru
      _
    // Predicated region
    $region62: #{dqn_forward.1} parent=1 // pred_check
      _
    $region63: #{dqn_forward.1} parent=1 // pred_check_branch
      %621 = sbr.rel (0) target = $region65
    $region64: #{dqn_forward.1} parent=1 // pred_region
      _
    $region65: #{dqn_forward.1} parent=1 // pred_fallthru
      _
    %622 = vsyncpa [#allocation3], 1
    %623 = vsyncpa [#allocation5], 1
    %624 = vsyncpa [#allocation8], 1

</llo_original>
